<compile_context>
chip_gen: v6e
topology: v6e:2x2x1
jax: 0.10.0
libtpu: 0.0.40
codegen_flags: <defaults>
</compile_context>

<pallas_src>
import functools

import jax
import jax.numpy as jnp
from jax.experimental import pallas as pl
from jax.experimental.pallas import tpu as pltpu

# ---- config (matches MixtureFlowConfig defaults) -----------------------------
N_EXPERTS = 4
DIM = 2
GATING_HIDDEN = 32
LN_EPS = 1e-5


def _layernorm(h, gamma, beta, axis):
    mu = jnp.mean(h, axis=axis, keepdims=True)
    var = jnp.mean(jnp.square(h - mu), axis=axis, keepdims=True)
    return (h - mu) * jax.lax.rsqrt(var + LN_EPS) * gamma + beta


def gating_kernel(t_ref, x_ref, w1x_ref, w2_ref, w3_ref, vec_ref, out_ref):
    """Feature-major forward: all activations are (features, batch_tile)."""
    E = w3_ref.shape[0]

    tT = t_ref[...]                            # (1,   TB)
    xT = x_ref[...]                            # (dim, TB)
    vec = vec_ref[...]                         # (H, 8) packed small params
    b1, g1, be1 = vec[:, 0:1], vec[:, 1:2], vec[:, 2:3]
    b2, g2, be2 = vec[:, 3:4], vec[:, 4:5], vec[:, 5:6]
    b3 = vec[:E, 6:7]                          # (E, 1)
    w1t = vec[:, 7:8]                          # (H, 1)  time column of W1

    # Linear(dim+1 -> H), concat-free: W1_x @ x^T + w1_t * t^T + b1
    h = jnp.dot(w1x_ref[...], xT, preferred_element_type=jnp.float32)
    h = h + w1t * tT + b1                      # (H, TB)
    h = _layernorm(h, g1, be1, axis=0)
    h = jnp.maximum(h, 0.0)

    # Dropout(p) is identity in eval mode.
    # TODO(synk): training-mode stochastic dropout not implemented (would use
    # pltpu.prng_seed / pltpu.stateful_bernoulli).

    # Linear(H -> H) + LayerNorm + ReLU
    h = jnp.dot(w2_ref[...], h, preferred_element_type=jnp.float32) + b2
    h = _layernorm(h, g2, be2, axis=0)
    h = jnp.maximum(h, 0.0)

    # Linear(H -> E) + softmax over experts (sublane axis, E rows)
    logits = jnp.dot(w3_ref[...], h, preferred_element_type=jnp.float32) + b3
    m = jnp.max(logits, axis=0, keepdims=True)
    e = jnp.exp(logits - m)
    denom = jnp.sum(e, axis=0, keepdims=True)
    # Exact divide (not approx reciprocal): keeps softmax rows summing to 1
    # within float32 rounding; cost is negligible for this memory-bound kernel.
    out_ref[...] = e / denom                   # lane-dense store


def gating_network_forward(t, x_t, params, *, batch_tile=256):
    """t: (B,1), x_t: (B,dim) -> (B, n_experts) softmax probabilities."""
    B = t.shape[0]
    dim = x_t.shape[1]
    H = params["w1"].shape[0]
    E = params["w3"].shape[0]
    assert batch_tile % 128 == 0, "batch_tile must be a multiple of 128 lanes"

    n_tiles = pl.cdiv(B, batch_tile)
    B_pad = n_tiles * batch_tile

    # Transpose so the batch rides the lane axis; zero-pad the ragged tail.
    tT = jnp.pad(t.astype(jnp.float32).T, ((0, 0), (0, B_pad - B)))
    xT = jnp.pad(x_t.astype(jnp.float32).T, ((0, 0), (0, B_pad - B)))

    # Pack biases / LN affines / b3 / W1 time-column into one (H, 8) blob.
    b3_pad = jnp.zeros((H,), jnp.float32).at[:E].set(params["b3"])
    vec = jnp.stack([params["b1"], params["g1"], params["be1"],
                     params["b2"], params["g2"], params["be2"],
                     b3_pad, params["w1"][:, 0]], axis=1)          # (H, 8)
    w1x = params["w1"][:, 1:]                                      # (H, dim)

    full = lambda shape: pl.BlockSpec(shape, lambda i: (0, 0))
    out_t = pl.pallas_call(
        gating_kernel,
        out_shape=jax.ShapeDtypeStruct((E, B_pad), jnp.float32),
        grid_spec=pltpu.PrefetchScalarGridSpec(
            num_scalar_prefetch=0,
            grid=(n_tiles,),
            in_specs=[
                pl.BlockSpec((1, batch_tile), lambda i: (0, i)),
                pl.BlockSpec((dim, batch_tile), lambda i: (0, i)),
                full((H, dim)), full((H, H)), full((E, H)), full((H, 8)),
            ],
            out_specs=pl.BlockSpec((E, batch_tile), lambda i: (0, i)),
        ),
        compiler_params=pltpu.CompilerParams(
            dimension_semantics=("parallel",)),
    )(tT, xT, w1x, params["w2"], params["w3"], vec)

    return out_t[:, :B].T                                          # (B, E)


def init_params(key, dim=DIM, hidden=GATING_HIDDEN, n_experts=N_EXPERTS):
    """Deterministic synthetic parameters in PyTorch Linear layout (out, in)."""
    ks = jax.random.split(key, 6)
    fin = dim + 1

    def lin(kw, kb, n_in, n_out):
        bound = 1.0 / jnp.sqrt(n_in)
        w = jax.random.uniform(kw, (n_out, n_in), jnp.float32, -bound, bound)
        b = jax.random.uniform(kb, (n_out,), jnp.float32, -bound, bound)
        return w, b

    w1, b1 = lin(ks[0], ks[1], fin, hidden)
    w2, b2 = lin(ks[2], ks[3], hidden, hidden)
    w3, b3 = lin(ks[4], ks[5], hidden, n_experts)
    ones = jnp.ones((hidden,), jnp.float32)
    zeros = jnp.zeros((hidden,), jnp.float32)
    return dict(w1=w1, b1=b1, g1=ones, be1=zeros,
                w2=w2, b2=b2, g2=ones, be2=zeros,
                w3=w3, b3=b3)


def reference_forward(t, x_t, p):
    """Pure-JAX reference mirroring the PyTorch module (eval mode)."""
    x = jnp.concatenate((t, x_t), axis=-1)
    h = x @ p["w1"].T + p["b1"]
    h = _layernorm(h, p["g1"], p["be1"], axis=-1)
    h = jnp.maximum(h, 0.0)
    h = h @ p["w2"].T + p["b2"]
    h = _layernorm(h, p["g2"], p["be2"], axis=-1)
    h = jnp.maximum(h, 0.0)
    logits = h @ p["w3"].T + p["b3"]
    return jax.nn.softmax(logits, axis=-1)


if __name__ == "__main__":
    key = jax.random.PRNGKey(0)
    kp, kt, kx = jax.random.split(key, 3)

    # B deliberately not a tile multiple: exercises pl.cdiv + tail padding and
    # yields a 2-step parallel grid (both v7x TensorCores busy).
    B = 300
    params = init_params(kp)
    t = jax.random.uniform(kt, (B, 1), jnp.float32)
    x_t = jax.random.normal(kx, (B, DIM), jnp.float32)

    fwd = jax.jit(functools.partial(gating_network_forward, batch_tile=256))
    out = jax.block_until_ready(fwd(t, x_t, params))

    ref = reference_forward(t, x_t, params)
    assert out.shape == (B, N_EXPERTS)
    assert jnp.allclose(out, ref, atol=1e-4, rtol=1e-4), "mismatch vs reference"
    assert jnp.allclose(jnp.sum(out, axis=-1), 1.0, atol=1e-4), "rows must sum to 1"

    print("KERNEL_OK")
</pallas_src>

<mosaic_0001>
module attributes {stable_mosaic.version = 11 : i64} {
  func.func @gating_kernel(%arg0: i32, %arg1: memref<1x256xf32, #tpu.memory_space<vmem>>, %arg2: memref<2x256xf32, #tpu.memory_space<vmem>>, %arg3: memref<32x2xf32, #tpu.memory_space<vmem>>, %arg4: memref<32x32xf32, #tpu.memory_space<vmem>>, %arg5: memref<4x32xf32, #tpu.memory_space<vmem>>, %arg6: memref<32x8xf32, #tpu.memory_space<vmem>>, %arg7: memref<4x256xf32, #tpu.memory_space<vmem>>) attributes {dimension_semantics = [#tpu.dimension_semantics<parallel>], iteration_bounds = array<i64: 2>, scalar_prefetch = 0 : i64, scratch_operands = 0 : i64, tpu.core_type = #tpu.core_type<tc>, window_params = [{transform_indices = @transform_0, window_bounds = array<i64: 1, 256>}, {transform_indices = @transform_1, window_bounds = array<i64: 2, 256>}, {pipeline_mode = #tpu.pipeline_mode<synchronous>, transform_indices = @transform_2, window_bounds = array<i64: 32, 2>}, {pipeline_mode = #tpu.pipeline_mode<synchronous>, transform_indices = @transform_3, window_bounds = array<i64: 32, 32>}, {pipeline_mode = #tpu.pipeline_mode<synchronous>, transform_indices = @transform_4, window_bounds = array<i64: 4, 32>}, {pipeline_mode = #tpu.pipeline_mode<synchronous>, transform_indices = @transform_5, window_bounds = array<i64: 32, 8>}, {transform_indices = @transform_6, window_bounds = array<i64: 4, 256>}]} {
    %c0 = arith.constant 0 : index
    %c0_0 = arith.constant 0 : index
    %0 = vector.load %arg1[%c0, %c0_0] : memref<1x256xf32, #tpu.memory_space<vmem>>, vector<1x256xf32>
    %c0_1 = arith.constant 0 : index
    %c0_2 = arith.constant 0 : index
    %1 = vector.load %arg2[%c0_1, %c0_2] : memref<2x256xf32, #tpu.memory_space<vmem>>, vector<2x256xf32>
    %c0_3 = arith.constant 0 : index
    %c0_4 = arith.constant 0 : index
    %2 = vector.load %arg6[%c0_3, %c0_4] : memref<32x8xf32, #tpu.memory_space<vmem>>, vector<32x8xf32>
    %3 = vector.extract_strided_slice %2 {offsets = [0, 0], sizes = [32, 1], strides = [1, 1]} : vector<32x8xf32> to vector<32x1xf32>
    %4 = vector.extract_strided_slice %2 {offsets = [0, 1], sizes = [32, 1], strides = [1, 1]} : vector<32x8xf32> to vector<32x1xf32>
    %5 = vector.extract_strided_slice %2 {offsets = [0, 2], sizes = [32, 1], strides = [1, 1]} : vector<32x8xf32> to vector<32x1xf32>
    %6 = vector.extract_strided_slice %2 {offsets = [0, 3], sizes = [32, 1], strides = [1, 1]} : vector<32x8xf32> to vector<32x1xf32>
    %7 = vector.extract_strided_slice %2 {offsets = [0, 4], sizes = [32, 1], strides = [1, 1]} : vector<32x8xf32> to vector<32x1xf32>
    %8 = vector.extract_strided_slice %2 {offsets = [0, 5], sizes = [32, 1], strides = [1, 1]} : vector<32x8xf32> to vector<32x1xf32>
    %9 = vector.extract_strided_slice %2 {offsets = [0, 6], sizes = [4, 1], strides = [1, 1]} : vector<32x8xf32> to vector<4x1xf32>
    %10 = vector.extract_strided_slice %2 {offsets = [0, 7], sizes = [32, 1], strides = [1, 1]} : vector<32x8xf32> to vector<32x1xf32>
    %c0_5 = arith.constant 0 : index
    %c0_6 = arith.constant 0 : index
    %11 = vector.load %arg3[%c0_5, %c0_6] : memref<32x2xf32, #tpu.memory_space<vmem>>, vector<32x2xf32>
    %cst = arith.constant dense<0.000000e+00> : vector<32x256xf32>
    %12 = tpu.matmul %11, %1, %cst {dimension_numbers = #tpu.dot_dimension_numbers<[1], [0], [0], [1], [0, 0, 1, 1], [], []>} : vector<32x2xf32>, vector<2x256xf32>, vector<32x256xf32> -> vector<32x256xf32>
    %13 = vector.broadcast %10 : vector<32x1xf32> to vector<32x256xf32>
    %14 = vector.broadcast %0 : vector<1x256xf32> to vector<32x256xf32>
    %15 = arith.mulf %13, %14 : vector<32x256xf32>
    %16 = arith.addf %12, %15 : vector<32x256xf32>
    %17 = vector.broadcast %3 : vector<32x1xf32> to vector<32x256xf32>
    %18 = arith.addf %16, %17 : vector<32x256xf32>
    %cst_7 = arith.constant dense<0.000000e+00> : vector<256xf32>
    %19 = vector.multi_reduction <add>, %18, %cst_7 [0] : vector<32x256xf32> to vector<256xf32>
    %20 = vector.shape_cast %19 : vector<256xf32> to vector<1x256xf32>
    %cst_8 = arith.constant 3.200000e+01 : f32
    %21 = vector.broadcast %cst_8 : f32 to vector<1x256xf32>
    %22 = arith.divf %20, %21 : vector<1x256xf32>
    %23 = vector.broadcast %22 : vector<1x256xf32> to vector<32x256xf32>
    %24 = arith.subf %18, %23 : vector<32x256xf32>
    %25 = arith.mulf %24, %24 : vector<32x256xf32>
    %cst_9 = arith.constant dense<0.000000e+00> : vector<256xf32>
    %26 = vector.multi_reduction <add>, %25, %cst_9 [0] : vector<32x256xf32> to vector<256xf32>
    %27 = vector.shape_cast %26 : vector<256xf32> to vector<1x256xf32>
    %cst_10 = arith.constant 3.200000e+01 : f32
    %28 = vector.broadcast %cst_10 : f32 to vector<1x256xf32>
    %29 = arith.divf %27, %28 : vector<1x256xf32>
    %30 = vector.broadcast %22 : vector<1x256xf32> to vector<32x256xf32>
    %31 = arith.subf %18, %30 : vector<32x256xf32>
    %cst_11 = arith.constant 9.99999974E-6 : f32
    %32 = vector.broadcast %cst_11 : f32 to vector<1x256xf32>
    %33 = arith.addf %29, %32 : vector<1x256xf32>
    %34 = math.rsqrt %33 : vector<1x256xf32>
    %35 = vector.broadcast %34 : vector<1x256xf32> to vector<32x256xf32>
    %36 = arith.mulf %31, %35 : vector<32x256xf32>
    %37 = vector.broadcast %4 : vector<32x1xf32> to vector<32x256xf32>
    %38 = arith.mulf %36, %37 : vector<32x256xf32>
    %39 = vector.broadcast %5 : vector<32x1xf32> to vector<32x256xf32>
    %40 = arith.addf %38, %39 : vector<32x256xf32>
    %cst_12 = arith.constant 0.000000e+00 : f32
    %41 = vector.broadcast %cst_12 : f32 to vector<32x256xf32>
    %42 = arith.maximumf %40, %41 : vector<32x256xf32>
    %c0_13 = arith.constant 0 : index
    %c0_14 = arith.constant 0 : index
    %43 = vector.load %arg4[%c0_13, %c0_14] : memref<32x32xf32, #tpu.memory_space<vmem>>, vector<32x32xf32>
    %cst_15 = arith.constant dense<0.000000e+00> : vector<32x256xf32>
    %44 = tpu.matmul %43, %42, %cst_15 {dimension_numbers = #tpu.dot_dimension_numbers<[1], [0], [0], [1], [0, 0, 1, 1], [], []>} : vector<32x32xf32>, vector<32x256xf32>, vector<32x256xf32> -> vector<32x256xf32>
    %45 = vector.broadcast %6 : vector<32x1xf32> to vector<32x256xf32>
    %46 = arith.addf %44, %45 : vector<32x256xf32>
    %cst_16 = arith.constant dense<0.000000e+00> : vector<256xf32>
    %47 = vector.multi_reduction <add>, %46, %cst_16 [0] : vector<32x256xf32> to vector<256xf32>
    %48 = vector.shape_cast %47 : vector<256xf32> to vector<1x256xf32>
    %cst_17 = arith.constant 3.200000e+01 : f32
    %49 = vector.broadcast %cst_17 : f32 to vector<1x256xf32>
    %50 = arith.divf %48, %49 : vector<1x256xf32>
    %51 = vector.broadcast %50 : vector<1x256xf32> to vector<32x256xf32>
    %52 = arith.subf %46, %51 : vector<32x256xf32>
    %53 = arith.mulf %52, %52 : vector<32x256xf32>
    %cst_18 = arith.constant dense<0.000000e+00> : vector<256xf32>
    %54 = vector.multi_reduction <add>, %53, %cst_18 [0] : vector<32x256xf32> to vector<256xf32>
    %55 = vector.shape_cast %54 : vector<256xf32> to vector<1x256xf32>
    %cst_19 = arith.constant 3.200000e+01 : f32
    %56 = vector.broadcast %cst_19 : f32 to vector<1x256xf32>
    %57 = arith.divf %55, %56 : vector<1x256xf32>
    %58 = vector.broadcast %50 : vector<1x256xf32> to vector<32x256xf32>
    %59 = arith.subf %46, %58 : vector<32x256xf32>
    %cst_20 = arith.constant 9.99999974E-6 : f32
    %60 = vector.broadcast %cst_20 : f32 to vector<1x256xf32>
    %61 = arith.addf %57, %60 : vector<1x256xf32>
    %62 = math.rsqrt %61 : vector<1x256xf32>
    %63 = vector.broadcast %62 : vector<1x256xf32> to vector<32x256xf32>
    %64 = arith.mulf %59, %63 : vector<32x256xf32>
    %65 = vector.broadcast %7 : vector<32x1xf32> to vector<32x256xf32>
    %66 = arith.mulf %64, %65 : vector<32x256xf32>
    %67 = vector.broadcast %8 : vector<32x1xf32> to vector<32x256xf32>
    %68 = arith.addf %66, %67 : vector<32x256xf32>
    %cst_21 = arith.constant 0.000000e+00 : f32
    %69 = vector.broadcast %cst_21 : f32 to vector<32x256xf32>
    %70 = arith.maximumf %68, %69 : vector<32x256xf32>
    %c0_22 = arith.constant 0 : index
    %c0_23 = arith.constant 0 : index
    %71 = vector.load %arg5[%c0_22, %c0_23] : memref<4x32xf32, #tpu.memory_space<vmem>>, vector<4x32xf32>
    %cst_24 = arith.constant dense<0.000000e+00> : vector<4x256xf32>
    %72 = tpu.matmul %71, %70, %cst_24 {dimension_numbers = #tpu.dot_dimension_numbers<[1], [0], [0], [1], [0, 0, 1, 1], [], []>} : vector<4x32xf32>, vector<32x256xf32>, vector<4x256xf32> -> vector<4x256xf32>
    %73 = vector.broadcast %9 : vector<4x1xf32> to vector<4x256xf32>
    %74 = arith.addf %72, %73 : vector<4x256xf32>
    %cst_25 = arith.constant dense<0xFF800000> : vector<256xf32>
    %75 = vector.multi_reduction <maximumf>, %74, %cst_25 [0] : vector<4x256xf32> to vector<256xf32>
    %76 = vector.shape_cast %75 : vector<256xf32> to vector<1x256xf32>
    %77 = vector.broadcast %76 : vector<1x256xf32> to vector<4x256xf32>
    %78 = arith.subf %74, %77 : vector<4x256xf32>
    %79 = math.exp %78 : vector<4x256xf32>
    %cst_26 = arith.constant dense<0.000000e+00> : vector<256xf32>
    %80 = vector.multi_reduction <add>, %79, %cst_26 [0] : vector<4x256xf32> to vector<256xf32>
    %81 = vector.shape_cast %80 : vector<256xf32> to vector<1x256xf32>
    %82 = vector.broadcast %81 : vector<1x256xf32> to vector<4x256xf32>
    %83 = arith.divf %79, %82 : vector<4x256xf32>
    %c0_27 = arith.constant 0 : index
    %c0_28 = arith.constant 0 : index
    %84 = vector.load %arg7[%c0_27, %c0_28] : memref<4x256xf32, #tpu.memory_space<vmem>>, vector<4x256xf32>
    tpu.vector_store %arg7[%c0_27, %c0_28], %83 {strides = array<i32>} : memref<4x256xf32, #tpu.memory_space<vmem>>, vector<4x256xf32>,
    return
  }
  func.func @transform_0(%arg0: i32) -> (i32, i32) {
    %c0_i32 = arith.constant 0 : i32
    %c0_i32_0 = arith.constant 0 : i32
    return %c0_i32, %arg0 : i32, i32
  }
  func.func @transform_1(%arg0: i32) -> (i32, i32) {
    %c0_i32 = arith.constant 0 : i32
    %c0_i32_0 = arith.constant 0 : i32
    return %c0_i32, %arg0 : i32, i32
  }
  func.func @transform_2(%arg0: i32) -> (i32, i32) {
    %c0_i32 = arith.constant 0 : i32
    %c0_i32_0 = arith.constant 0 : i32
    %c0_i32_1 = arith.constant 0 : i32
    return %c0_i32, %c0_i32_0 : i32, i32
  }
  func.func @transform_3(%arg0: i32) -> (i32, i32) {
    %c0_i32 = arith.constant 0 : i32
    %c0_i32_0 = arith.constant 0 : i32
    %c0_i32_1 = arith.constant 0 : i32
    return %c0_i32, %c0_i32_0 : i32, i32
  }
  func.func @transform_4(%arg0: i32) -> (i32, i32) {
    %c0_i32 = arith.constant 0 : i32
    %c0_i32_0 = arith.constant 0 : i32
    %c0_i32_1 = arith.constant 0 : i32
    return %c0_i32, %c0_i32_0 : i32, i32
  }
  func.func @transform_5(%arg0: i32) -> (i32, i32) {
    %c0_i32 = arith.constant 0 : i32
    %c0_i32_0 = arith.constant 0 : i32
    %c0_i32_1 = arith.constant 0 : i32
    return %c0_i32, %c0_i32_0 : i32, i32
  }
  func.func @transform_6(%arg0: i32) -> (i32, i32) {
    %c0_i32 = arith.constant 0 : i32
    %c0_i32_0 = arith.constant 0 : i32
    return %c0_i32, %arg0 : i32, i32
  }
}

</mosaic_0001>

<llo_original>
// kernel: gating_network_forward.1
$region0: #{gating_network_forward.1}
  #allocation0 [shape = 'u32[]', space=smem, size = 0x4, offset = 0x4, fixed_abs, tag = 'smem constant byte address 0x4 - core index']
  #allocation1 [shape = 'u32[144,128]{1,0:T(1,128)}', space=vmem, size = 0x12000, scoped, tag = 'internal scratch']
  %s0 = inlined_call_operand.vmem [shape: f32[1,512], index: 0, kind: input, shape index: {}]
  %s1 = inlined_call_operand.vmem [shape: f32[2,512], index: 1, kind: input, shape index: {}]
  %s2 = inlined_call_operand.vmem [shape: f32[32,2], index: 2, kind: input, shape index: {}]
  %s3 = inlined_call_operand.vmem [shape: f32[32,32], index: 3, kind: input, shape index: {}]
  %s4 = inlined_call_operand.vmem [shape: f32[4,32], index: 4, kind: input, shape index: {}]
  %s5 = inlined_call_operand.vmem [shape: f32[32,8], index: 5, kind: input, shape index: {}]
  %s6 = inlined_call_operand.vmem [shape: f32[4,512], index: 6, kind: output, shape index: {}]
  %s7 = sld [smem:[#allocation0]]
  $region57: #{gating_network_forward.1} parent=0
    _
  %s9 = ssub.s32 1, %s7
  %s10 = scalar_select 0, %s9, %s7
  loop: start=0, step=1, limit=4
  $region2: #{gating_network_forward.1} parent=0 // loop_pre_header
    _
  $region3: #{gating_network_forward.1} parent=0 // loop_header
    %s12 = sphi 0, %s16
    %p13 = scmp.ge.s32.totalorder %s12, 4
    %s22 = sphi 0, %s24
    %s25 = sphi 0, %s22
    %s26 = sphi 0, %s25
    %s42 = sphi 0, %s26
    %s48 = sphi 0, %s50
    %s51 = sphi 0, %s48
    %s52 = sphi 0, %s51
    %s68 = sphi 0, %s52
    %s72 = sphi 0, %s72
    %s74 = sphi 0, %s72
    %s75 = sphi 0, %s74
    %s89 = sphi 0, %s75
    %s93 = sphi 0, %s93
    %s95 = sphi 0, %s93
    %s96 = sphi 0, %s95
    %s110 = sphi 0, %s96
    %s114 = sphi 0, %s114
    %s116 = sphi 0, %s114
    %s117 = sphi 0, %s116
    %s131 = sphi 0, %s117
    %s135 = sphi 0, %s135
    %s137 = sphi 0, %s135
    %s138 = sphi 0, %s137
    %s152 = sphi 0, %s138
    %s158 = sphi 0, %s160
    %s161 = sphi 0, %s158
    %s162 = sphi 0, %s161
    %s178 = sphi 0, %s162
  $region4: #{gating_network_forward.1} parent=0 // loop_header_branch
    %15 = sbr.rel (%p13) target = $region8
  $region5: #{gating_network_forward.1} parent=0 // loop_body
    %s17 = ssub.s32 %s12, 1
    %s18 = ssub.s32 %s12, 2
    %s19 = sadd.s32 %s12, 1
    %s20 = ssub.s32 %s12, %s19
    %p21 = scmp.eq.s32.totalorder %s20, 0
    %s23 = sadd.s32 %s22, 1
    %s24 = scalar_select %p21, %s22, %s23
    %p27 = pneg %p21
    %p28 = scmp.eq.s32.totalorder %s12, 1
    %p29 = por %p27, %p28
    %p30 = scmp.ne.s32.totalorder %s22, %s25
    %p31 = scmp.eq.s32.totalorder %s12, 0
    %p32 = por %p30, %p31
    %p33 = scmp.ne.s32.totalorder %s22, %s25
    %p34 = scmp.eq.s32.totalorder %s17, 1
    %p35 = por %p33, %p34
    %p36 = scmp.ne.s32.totalorder %s25, %s26
    %p37 = scmp.eq.s32.totalorder %s17, 0
    %p38 = por %p36, %p37
    %p39 = scmp.ne.s32.totalorder %s25, %s26
    %p40 = scmp.eq.s32.totalorder %s18, 1
    %p41 = por %p39, %p40
    %p43 = scmp.ne.s32.totalorder %s26, %s42
    %p44 = scmp.eq.s32.totalorder %s18, 0
    %p45 = por %p43, %p44
    %s46 = ssub.s32 %s12, %s19
    %p47 = scmp.eq.s32.totalorder %s46, 0
    %s49 = sadd.s32 %s48, 1
    %s50 = scalar_select %p47, %s48, %s49
    %p53 = pneg %p47
    %p54 = scmp.eq.s32.totalorder %s12, 1
    %p55 = por %p53, %p54
    %p56 = scmp.ne.s32.totalorder %s48, %s51
    %p57 = scmp.eq.s32.totalorder %s12, 0
    %p58 = por %p56, %p57
    %p59 = scmp.ne.s32.totalorder %s48, %s51
    %p60 = scmp.eq.s32.totalorder %s17, 1
    %p61 = por %p59, %p60
    %p62 = scmp.ne.s32.totalorder %s51, %s52
    %p63 = scmp.eq.s32.totalorder %s17, 0
    %p64 = por %p62, %p63
    %p65 = scmp.ne.s32.totalorder %s51, %s52
    %p66 = scmp.eq.s32.totalorder %s18, 1
    %p67 = por %p65, %p66
    %p69 = scmp.ne.s32.totalorder %s52, %s68
    %p70 = scmp.eq.s32.totalorder %s18, 0
    %p71 = por %p69, %p70
    %s73 = sadd.s32 %s72, 1
    %p76 = scmp.eq.s32.totalorder %s12, 1
    %p77 = scmp.ne.s32.totalorder %s72, %s74
    %p78 = scmp.eq.s32.totalorder %s12, 0
    %p79 = por %p77, %p78
    %p80 = scmp.ne.s32.totalorder %s72, %s74
    %p81 = scmp.eq.s32.totalorder %s17, 1
    %p82 = por %p80, %p81
    %p83 = scmp.ne.s32.totalorder %s74, %s75
    %p84 = scmp.eq.s32.totalorder %s17, 0
    %p85 = por %p83, %p84
    %p86 = scmp.ne.s32.totalorder %s74, %s75
    %p87 = scmp.eq.s32.totalorder %s18, 1
    %p88 = por %p86, %p87
    %p90 = scmp.ne.s32.totalorder %s75, %s89
    %p91 = scmp.eq.s32.totalorder %s18, 0
    %p92 = por %p90, %p91
    %s94 = sadd.s32 %s93, 1
    %p97 = scmp.eq.s32.totalorder %s12, 1
    %p98 = scmp.ne.s32.totalorder %s93, %s95
    %p99 = scmp.eq.s32.totalorder %s12, 0
    %p100 = por %p98, %p99
    %p101 = scmp.ne.s32.totalorder %s93, %s95
    %p102 = scmp.eq.s32.totalorder %s17, 1
    %p103 = por %p101, %p102
    %p104 = scmp.ne.s32.totalorder %s95, %s96
    %p105 = scmp.eq.s32.totalorder %s17, 0
    %p106 = por %p104, %p105
    %p107 = scmp.ne.s32.totalorder %s95, %s96
    %p108 = scmp.eq.s32.totalorder %s18, 1
    %p109 = por %p107, %p108
    %p111 = scmp.ne.s32.totalorder %s96, %s110
    %p112 = scmp.eq.s32.totalorder %s18, 0
    %p113 = por %p111, %p112
    %s115 = sadd.s32 %s114, 1
    %p118 = scmp.eq.s32.totalorder %s12, 1
    %p119 = scmp.ne.s32.totalorder %s114, %s116
    %p120 = scmp.eq.s32.totalorder %s12, 0
    %p121 = por %p119, %p120
    %p122 = scmp.ne.s32.totalorder %s114, %s116
    %p123 = scmp.eq.s32.totalorder %s17, 1
    %p124 = por %p122, %p123
    %p125 = scmp.ne.s32.totalorder %s116, %s117
    %p126 = scmp.eq.s32.totalorder %s17, 0
    %p127 = por %p125, %p126
    %p128 = scmp.ne.s32.totalorder %s116, %s117
    %p129 = scmp.eq.s32.totalorder %s18, 1
    %p130 = por %p128, %p129
    %p132 = scmp.ne.s32.totalorder %s117, %s131
    %p133 = scmp.eq.s32.totalorder %s18, 0
    %p134 = por %p132, %p133
    %s136 = sadd.s32 %s135, 1
    %p139 = scmp.eq.s32.totalorder %s12, 1
    %p140 = scmp.ne.s32.totalorder %s135, %s137
    %p141 = scmp.eq.s32.totalorder %s12, 0
    %p142 = por %p140, %p141
    %p143 = scmp.ne.s32.totalorder %s135, %s137
    %p144 = scmp.eq.s32.totalorder %s17, 1
    %p145 = por %p143, %p144
    %p146 = scmp.ne.s32.totalorder %s137, %s138
    %p147 = scmp.eq.s32.totalorder %s17, 0
    %p148 = por %p146, %p147
    %p149 = scmp.ne.s32.totalorder %s137, %s138
    %p150 = scmp.eq.s32.totalorder %s18, 1
    %p151 = por %p149, %p150
    %p153 = scmp.ne.s32.totalorder %s138, %s152
    %p154 = scmp.eq.s32.totalorder %s18, 0
    %p155 = por %p153, %p154
    %s156 = ssub.s32 %s12, %s19
    %p157 = scmp.eq.s32.totalorder %s156, 0
    %s159 = sadd.s32 %s158, 1
    %s160 = scalar_select %p157, %s158, %s159
    %p163 = pneg %p157
    %p164 = scmp.eq.s32.totalorder %s12, 1
    %p165 = por %p163, %p164
    %p166 = scmp.ne.s32.totalorder %s158, %s161
    %p167 = scmp.eq.s32.totalorder %s12, 0
    %p168 = por %p166, %p167
    %p169 = scmp.ne.s32.totalorder %s158, %s161
    %p170 = scmp.eq.s32.totalorder %s17, 1
    %p171 = por %p169, %p170
    %p172 = scmp.ne.s32.totalorder %s161, %s162
    %p173 = scmp.eq.s32.totalorder %s17, 0
    %p174 = por %p172, %p173
    %p175 = scmp.ne.s32.totalorder %s161, %s162
    %p176 = scmp.eq.s32.totalorder %s18, 1
    %p177 = por %p175, %p176
    %p179 = scmp.ne.s32.totalorder %s162, %s178
    %p180 = scmp.eq.s32.totalorder %s18, 0
    %p181 = por %p179, %p180
    %p182 = scmp.le.s32.totalorder 1, %s12
    %p183 = scmp.lt.s32.totalorder %s12, 3
    %p184 = pnand %p182, %p183
    %p185 = pneg %p184
    // Predicated region
    $region9: #{gating_network_forward.1} parent=5 // pred_check
      _
    $region10: #{gating_network_forward.1} parent=5 // pred_check_branch
      %187 = sbr.rel (%p184) target = $region12
    $region11: #{gating_network_forward.1} parent=5 // pred_region
      %s188 = ssub.s32 %s12, 1
      // Predicated region
      $region13: #{gating_network_forward.1} parent=11 // pred_check
        %p189 = pneg %p85
      $region14: #{gating_network_forward.1} parent=11 // pred_check_branch
        %191 = sbr.rel (%p189) target = $region16
      $region15: #{gating_network_forward.1} parent=11 // pred_region
        _
      $region16: #{gating_network_forward.1} parent=11 // pred_fallthru
        _
      // Predicated region
      $region17: #{gating_network_forward.1} parent=11 // pred_check
        %p192 = pneg %p106
      $region18: #{gating_network_forward.1} parent=11 // pred_check_branch
        %194 = sbr.rel (%p192) target = $region20
      $region19: #{gating_network_forward.1} parent=11 // pred_region
        _
      $region20: #{gating_network_forward.1} parent=11 // pred_fallthru
        _
      // Predicated region
      $region21: #{gating_network_forward.1} parent=11 // pred_check
        %p195 = pneg %p127
      $region22: #{gating_network_forward.1} parent=11 // pred_check_branch
        %197 = sbr.rel (%p195) target = $region24
      $region23: #{gating_network_forward.1} parent=11 // pred_region
        _
      $region24: #{gating_network_forward.1} parent=11 // pred_fallthru
        _
      // Predicated region
      $region25: #{gating_network_forward.1} parent=11 // pred_check
        %p198 = pneg %p148
      $region26: #{gating_network_forward.1} parent=11 // pred_check_branch
        %200 = sbr.rel (%p198) target = $region28
      $region27: #{gating_network_forward.1} parent=11 // pred_region
        _
      $region28: #{gating_network_forward.1} parent=11 // pred_fallthru
        _
    $region12: #{gating_network_forward.1} parent=5 // pred_fallthru
      _
    %p201 = scmp.lt.s32.totalorder %s12, 2
    // Predicated region
    $region29: #{gating_network_forward.1} parent=5 // pred_check
      %p202 = pneg %p201
    $region30: #{gating_network_forward.1} parent=5 // pred_check_branch
      %204 = sbr.rel (%p202) target = $region32
    $region31: #{gating_network_forward.1} parent=5 // pred_region
      // Predicated region
      $region33: #{gating_network_forward.1} parent=31 // pred_check
        %p205 = pneg %p32
      $region34: #{gating_network_forward.1} parent=31 // pred_check_branch
        %207 = sbr.rel (%p205) target = $region36
      $region35: #{gating_network_forward.1} parent=31 // pred_region
        %s208 = smul.u32 2, %s12
        %p209 = scmp.lt.s32.totalorder %s208, 3
        %s210 = scalar_select %p209, %s208, 3
        %s211 = scalar_lea.vmem %s0, %s210
        %s212 = smul.u32 2, %s12
      $region36: #{gating_network_forward.1} parent=31 // pred_fallthru
        _
      // Predicated region
      $region37: #{gating_network_forward.1} parent=31 // pred_check
        %p213 = pneg %p58
      $region38: #{gating_network_forward.1} parent=31 // pred_check_branch
        %215 = sbr.rel (%p213) target = $region40
      $region39: #{gating_network_forward.1} parent=31 // pred_region
        %s216 = smul.u32 2, %s12
        %p217 = scmp.lt.s32.totalorder %s216, 3
        %s218 = scalar_select %p217, %s216, 3
        %s219 = smul.addr %s218, 2
        %s220 = scalar_lea.vmem %s1, %s219
        %s221 = smul.u32 2, %s12
      $region40: #{gating_network_forward.1} parent=31 // pred_fallthru
        _
    $region32: #{gating_network_forward.1} parent=5 // pred_fallthru
      _
    %p222 = scmp.le.s32.totalorder 1, %s12
    %p223 = scmp.lt.s32.totalorder %s12, 3
    %p224 = pnand %p222, %p223
    %p225 = pneg %p224
    // Predicated region
    $region41: #{gating_network_forward.1} parent=5 // pred_check
      _
    $region42: #{gating_network_forward.1} parent=5 // pred_check_branch
      %227 = sbr.rel (%p224) target = $region44
    $region43: #{gating_network_forward.1} parent=5 // pred_region
      %s228 = ssub.s32 %s12, 1
      %s229 = smul.u32 2, %s17
      %p230 = scmp.lt.s32.totalorder %s229, 3
      %s231 = scalar_select %p230, %s229, 3
      %s232 = scalar_lea.vmem %s0, %s231
      %p233 = pneg %p38
      %p234 = pneg %p35
      %s235 = smul.u32 2, %s17
      %p236 = scmp.lt.s32.totalorder %s235, 3
      %s237 = scalar_select %p236, %s235, 3
      %s238 = smul.addr %s237, 2
      %s239 = scalar_lea.vmem %s1, %s238
      %p240 = pneg %p64
      %p241 = pneg %p61
      %p242 = pneg %p85
      %p243 = pneg %p82
      %p244 = pneg %p106
      %p245 = pneg %p103
      %p246 = pneg %p127
      %p247 = pneg %p124
      %p248 = pneg %p148
      %p249 = pneg %p145
      %p250 = pneg %p174
      %p251 = pneg %p171
      %s252 = smul.u32 2, %s17
      %p253 = scmp.lt.s32.totalorder %s252, 3
      %s254 = scalar_select %p253, %s252, 3
      %s255 = smul.addr %s254, 4
      %s256 = scalar_lea.vmem %s6, %s255
      %s257 = smul.u32 2, %s17
      %p258 = scmp.lt.s32.totalorder %s257, 3
      %s259 = scalar_select %p258, %s257, 3
      %s260 = scalar_lea.vmem %s0, %s259
      %s261 = smul.u32 2, %s17
      %s262 = smul.u32 2, %s17
      %p263 = scmp.lt.s32.totalorder %s262, 3
      %s264 = scalar_select %p263, %s262, 3
      %s265 = smul.addr %s264, 2
      %s266 = scalar_lea.vmem %s1, %s265
      %s267 = smul.u32 2, %s17
      %s268 = smul.u32 2, %s17
      %p269 = scmp.lt.s32.totalorder %s268, 3
      %s270 = scalar_select %p269, %s268, 3
      %s271 = smul.addr %s270, 4
      %s272 = scalar_lea.vmem %s6, %s271
      %s273 = smul.u32 2, %s17
      %v274 = vld [vmem:[%s260] sm:$0x3]
      %v275 = vld [vmem:[%s266] sm:$0xf]
      %v276 = vld [vmem:[%s5] sm:$0xff]
      %v277 = vld [vmem:[%s5 + $0x8] sm:$0xff]
      %v278 = vld [vmem:[%s5 + $0x10] sm:$0xff]
      %v279 = vld [vmem:[%s5 + $0x18] sm:$0xff]
      %v280 = vld [vmem:[%s2] sm:$0xff]
      %v281 = vld [vmem:[%s2 + $0x8] sm:$0xff]
      %v282 = vld [vmem:[%s2 + $0x10] sm:$0xff]
      %v283 = vld [vmem:[%s2 + $0x18] sm:$0xff]
      %285 = vset.pattern.permute.xlu0 7
      %286 = vperm.xlu0 %285, %v276
      %v287 = vpop.permute.xlu0 %286
      %290 = vset.pattern.permute.xlu0 7
      %291 = vperm.xlu0 %290, %v277
      %v292 = vpop.permute.xlu0 %291
      %295 = vset.pattern.permute.xlu0 7
      %296 = vperm.xlu0 %295, %v278
      %v297 = vpop.permute.xlu0 %296
      %300 = vset.pattern.permute.xlu0 7
      %301 = vperm.xlu0 %300, %v279
      %v302 = vpop.permute.xlu0 %301
      %v305 = vlaneseq
      %v306 = vshrl.u32 %v305, 7
      %v307 = vsub.s32 0, %v306
      %v308 = vrot.slane %v274, %v307
      %v309 = vlaneseq
      %v310 = vshrl.u32 %v309, 7
      %v311 = vsub.s32 1, %v310
      %v312 = vrot.slane %v274, %v311
      %v315 = vmul.f32 %v287, %v308
      %v316 = vmul.f32 %v287, %v312
      %v317 = vmul.f32 %v292, %v308
      %v318 = vmul.f32 %v292, %v312
      %v319 = vmul.f32 %v297, %v308
      %v320 = vmul.f32 %v297, %v312
      %v321 = vmul.f32 %v302, %v308
      %v322 = vmul.f32 %v302, %v312
      %v325 = vunpack.c.l.s4 1983009808
      %v326 = vunpack.c.0.s8 %v325
      %v327 = vlaneseq
      %v328 = vshrl.u32 %v327, 7
      %v329 = vsub.s32 %v326, %v328
      %v330 = vrot.slane %v275, %v329
      %v331 = vcombine.high %v330, %v330
      %vm332 = vcmask 15360
      %v334 = vsel %vm332, %v280, 0
      %v337 = vsel %vm332, %v281, 0
      %v340 = vsel %vm332, %v282, 0
      %v343 = vsel %vm332, %v283, 0
      %vm345 = vcmask 1041408
      %v346 = vsel %vm345, %v330, 0
      %v348 = vsel %vm345, %v331, 0
      %350 = vmatprep.subr.mxu0 0.0
      %351 = vmatpush1.msra.mxu0 0.0
      %352 = vmatprep.subr.mxu0 0.0
      %353 = vmatpush1.msra.mxu0 0.0
      %354 = vmatprep.subr.mxu0 0.0
      %355 = vmatpush1.msra.mxu0 0.0
      %356 = vmatprep.subr.mxu0 0.0
      %357 = vmatpush1.msra.mxu0 0.0
      %358 = vmatprep.subr.mxu0 0.0
      %359 = vmatpush1.msra.mxu0 0.0
      %360 = vmatprep.subr.mxu0 0.0
      %361 = vmatpush1.msra.mxu0 0.0
      %362 = vmatprep.subr.mxu0 0.0
      %363 = vmatpush1.msra.mxu0 0.0
      %364 = vmatprep.subr.mxu0 0.0
      %365 = vmatpush1.msra.mxu0 0.0
      %366 = vmatprep.subr.mxu0 0.0
      %367 = vmatpush1.msra.mxu0 0.0
      %368 = vmatprep.subr.mxu0 0.0
      %369 = vmatpush1.msra.mxu0 0.0
      %370 = vmatprep.subr.mxu0 0.0
      %371 = vmatpush1.msra.mxu0 0.0
      %372 = vmatprep.subr.mxu0 0.0
      %373 = vmatpush1.msra.mxu0 0.0
      %374 = vmatprep.subr.mxu0 0.0
      %375 = vmatpush1.msra.mxu0 0.0
      %376 = vmatprep.subr.mxu0 0.0
      %377 = vmatpush1.msra.mxu0 0.0
      %378 = vmatprep.subr.mxu0 0.0
      %379 = vmatpush1.msra.mxu0 0.0
      %380 = vmatprep.subr.mxu0 %v348
      %381 = vmatpush1.msra.mxu0 %v346
      %382 = vmatprep.subr.mxu0 0.0
      %383 = vmatpush2.msra.mxu0 0.0
      %384 = vmatprep.subr.mxu0 0.0
      %385 = vmatpush2.msra.mxu0 0.0
      %386 = vmatprep.subr.mxu0 0.0
      %387 = vmatpush2.msra.mxu0 0.0
      %388 = vmatprep.subr.mxu0 0.0
      %389 = vmatpush2.msra.mxu0 0.0
      %390 = vmatprep.subr.mxu0 0.0
      %391 = vmatpush2.msra.mxu0 0.0
      %392 = vmatprep.subr.mxu0 0.0
      %393 = vmatpush2.msra.mxu0 0.0
      %394 = vmatprep.subr.mxu0 0.0
      %395 = vmatpush2.msra.mxu0 0.0
      %396 = vmatprep.subr.mxu0 0.0
      %397 = vmatpush2.msra.mxu0 0.0
      %398 = vmatprep.subr.mxu0 0.0
      %399 = vmatpush2.msra.mxu0 0.0
      %400 = vmatprep.subr.mxu0 0.0
      %401 = vmatpush2.msra.mxu0 0.0
      %402 = vmatprep.subr.mxu0 0.0
      %403 = vmatpush2.msra.mxu0 0.0
      %404 = vmatprep.subr.mxu0 0.0
      %405 = vmatpush2.msra.mxu0 0.0
      %406 = vmatprep.subr.mxu0 0.0
      %407 = vmatpush2.msra.mxu0 0.0
      %408 = vmatprep.subr.mxu0 0.0
      %409 = vmatpush2.msra.mxu0 0.0
      %410 = vmatprep.subr.mxu0 0.0
      %411 = vmatpush2.msra.mxu0 0.0
      %412 = vmatprep.subr.mxu0 0.0
      %413 = vmatpush2.msra.mxu0 0.0
      %414 = vmatprep.mubr.f32.mxu0 0.0
      %415 = vmatmul.mubr.f32.gmra.mxu0 %v334
      %v416 = vpop.f32.mrf.mxu0
      %v417 = vadd.f32 %v315, %v416
      %v418 = vpop.f32.mrf.mxu0
      %v419 = vadd.f32 %v316, %v418
      %420 = vmatprep.mubr.f32.mxu0 0.0
      %421 = vmatmul.mubr.f32.gmra.mxu0 %v337
      %v422 = vpop.f32.mrf.mxu0
      %v423 = vadd.f32 %v317, %v422
      %v424 = vpop.f32.mrf.mxu0
      %v425 = vadd.f32 %v318, %v424
      %426 = vmatprep.mubr.f32.mxu0 0.0
      %427 = vmatmul.mubr.f32.gmra.mxu0 %v340
      %v428 = vpop.f32.mrf.mxu0
      %v429 = vadd.f32 %v319, %v428
      %v430 = vpop.f32.mrf.mxu0
      %v431 = vadd.f32 %v320, %v430
      %432 = vmatprep.mubr.f32.mxu0 0.0
      %433 = vmatmul.mubr.f32.gmra.mxu0 %v343
      %v434 = vpop.f32.mrf.mxu0
      %v435 = vadd.f32 %v321, %v434
      %v436 = vpop.f32.mrf.mxu0
      %v437 = vadd.f32 %v322, %v436
      %438 = vdwg.mxu0
      %439 = vset.pattern.permute.xlu0 0
      %440 = vperm.xlu0 %439, %v276
      %v441 = vpop.permute.xlu0 %440
      %443 = vset.pattern.permute.xlu0 0
      %444 = vperm.xlu0 %443, %v277
      %v445 = vpop.permute.xlu0 %444
      %447 = vset.pattern.permute.xlu0 0
      %448 = vperm.xlu0 %447, %v278
      %v449 = vpop.permute.xlu0 %448
      %451 = vset.pattern.permute.xlu0 0
      %452 = vperm.xlu0 %451, %v279
      %v453 = vpop.permute.xlu0 %452
      %v455 = vadd.f32 %v417, %v441
      %v456 = vadd.f32 %v419, %v441
      %v457 = vadd.f32 %v423, %v445
      %v458 = vadd.f32 %v425, %v445
      %v459 = vadd.f32 %v429, %v449
      %v460 = vadd.f32 %v431, %v449
      %v461 = vadd.f32 %v435, %v453
      %v462 = vadd.f32 %v437, %v453
      %v463 = vadd.f32 %v455, %v457
      %v464 = vadd.f32 %v463, %v459
      %v465 = vadd.f32 %v464, %v461
      %v466 = vrot.slane %v465, 4
      %v467 = vadd.f32 %v465, %v466
      %v468 = vrot.slane %v467, 2
      %v469 = vadd.f32 %v467, %v468
      %v470 = vrot.slane %v469, 1
      %v471 = vadd.f32 %v469, %v470
      %v472 = vadd.f32 %v456, %v458
      %v473 = vadd.f32 %v472, %v460
      %v474 = vadd.f32 %v473, %v462
      %v475 = vrot.slane %v474, 4
      %v476 = vadd.f32 %v474, %v475
      %v477 = vrot.slane %v476, 2
      %v478 = vadd.f32 %v476, %v477
      %v479 = vrot.slane %v478, 1
      %v480 = vadd.f32 %v478, %v479
      %v481 = vrcp.pop 32.0
      %v482 = vmul.f32 %v471, %v481
      %v483 = vmul.f32 %v480, %v481
      %v484 = vsub.f32 %v455, %v482
      %v485 = vsub.f32 %v456, %v483
      %v486 = vsub.f32 %v457, %v482
      %v487 = vsub.f32 %v458, %v483
      %v488 = vsub.f32 %v459, %v482
      %v489 = vsub.f32 %v460, %v483
      %v490 = vsub.f32 %v461, %v482
      %v491 = vsub.f32 %v462, %v483
      %v492 = vmul.f32 %v484, %v484
      %v493 = vmul.f32 %v485, %v485
      %v494 = vmul.f32 %v486, %v486
      %v495 = vmul.f32 %v487, %v487
      %v496 = vmul.f32 %v488, %v488
      %v497 = vmul.f32 %v489, %v489
      %v498 = vmul.f32 %v490, %v490
      %v499 = vmul.f32 %v491, %v491
      %v500 = vadd.f32 %v492, %v494
      %v501 = vadd.f32 %v500, %v496
      %v502 = vadd.f32 %v501, %v498
      %v503 = vrot.slane %v502, 4
      %v504 = vadd.f32 %v502, %v503
      %v505 = vrot.slane %v504, 2
      %v506 = vadd.f32 %v504, %v505
      %v507 = vrot.slane %v506, 1
      %v508 = vadd.f32 %v506, %v507
      %v509 = vadd.f32 %v493, %v495
      %v510 = vadd.f32 %v509, %v497
      %v511 = vadd.f32 %v510, %v499
      %v512 = vrot.slane %v511, 4
      %v513 = vadd.f32 %v511, %v512
      %v514 = vrot.slane %v513, 2
      %v515 = vadd.f32 %v513, %v514
      %v516 = vrot.slane %v515, 1
      %v517 = vadd.f32 %v515, %v516
      %v518 = vmul.f32 %v508, %v481
      %v519 = vmul.f32 %v517, %v481
      %v520 = vadd.f32 %v518, 1e-05
      %v521 = vadd.f32 %v519, 1e-05
      %v522 = vrsqrt.pop %v520
      %v523 = vrsqrt.pop %v521
      %v524 = vmul.f32 %v484, %v522
      %v525 = vmul.f32 %v485, %v523
      %v526 = vmul.f32 %v486, %v522
      %v527 = vmul.f32 %v487, %v523
      %v528 = vmul.f32 %v488, %v522
      %v529 = vmul.f32 %v489, %v523
      %v530 = vmul.f32 %v490, %v522
      %v531 = vmul.f32 %v491, %v523
      %532 = vset.pattern.permute.xlu0 1
      %533 = vperm.xlu0 %532, %v276
      %v534 = vpop.permute.xlu0 %533
      %536 = vset.pattern.permute.xlu0 1
      %537 = vperm.xlu0 %536, %v277
      %v538 = vpop.permute.xlu0 %537
      %540 = vset.pattern.permute.xlu0 1
      %541 = vperm.xlu0 %540, %v278
      %v542 = vpop.permute.xlu0 %541
      %544 = vset.pattern.permute.xlu0 1
      %545 = vperm.xlu0 %544, %v279
      %v546 = vpop.permute.xlu0 %545
      %v548 = vmul.f32 %v524, %v534
      %v549 = vmul.f32 %v525, %v534
      %v550 = vmul.f32 %v526, %v538
      %v551 = vmul.f32 %v527, %v538
      %v552 = vmul.f32 %v528, %v542
      %v553 = vmul.f32 %v529, %v542
      %v554 = vmul.f32 %v530, %v546
      %v555 = vmul.f32 %v531, %v546
      %556 = vset.pattern.permute.xlu0 2
      %557 = vperm.xlu0 %556, %v276
      %v558 = vpop.permute.xlu0 %557
      %560 = vset.pattern.permute.xlu0 2
      %561 = vperm.xlu0 %560, %v277
      %v562 = vpop.permute.xlu0 %561
      %564 = vset.pattern.permute.xlu0 2
      %565 = vperm.xlu0 %564, %v278
      %v566 = vpop.permute.xlu0 %565
      %568 = vset.pattern.permute.xlu0 2
      %569 = vperm.xlu0 %568, %v279
      %v570 = vpop.permute.xlu0 %569
      %v572 = vadd.f32 %v548, %v558
      %v573 = vadd.f32 %v549, %v558
      %v574 = vadd.f32 %v550, %v562
      %v575 = vadd.f32 %v551, %v562
      %v576 = vadd.f32 %v552, %v566
      %v577 = vadd.f32 %v553, %v566
      %v578 = vadd.f32 %v554, %v570
      %v579 = vadd.f32 %v555, %v570
      %v580 = vmax.f32 %v572, 0.0
      %v581 = vmax.f32 %v573, 0.0
      %v582 = vmax.f32 %v574, 0.0
      %v583 = vmax.f32 %v575, 0.0
      %v584 = vmax.f32 %v576, 0.0
      %v585 = vmax.f32 %v577, 0.0
      %v586 = vmax.f32 %v578, 0.0
      %v587 = vmax.f32 %v579, 0.0
      %v588 = vld [vmem:[%s3] sm:$0xff]
      %v589 = vld [vmem:[%s3 + $0x8] sm:$0xff]
      %v590 = vld [vmem:[%s3 + $0x10] sm:$0xff]
      %v591 = vld [vmem:[%s3 + $0x18] sm:$0xff]
      %592 = vset.pattern.permute.xlu0 3
      %593 = vperm.xlu0 %592, %v276
      %v594 = vpop.permute.xlu0 %593
      %596 = vset.pattern.permute.xlu0 3
      %597 = vperm.xlu0 %596, %v277
      %v598 = vpop.permute.xlu0 %597
      %600 = vset.pattern.permute.xlu0 3
      %601 = vperm.xlu0 %600, %v278
      %v602 = vpop.permute.xlu0 %601
      %604 = vset.pattern.permute.xlu0 3
      %605 = vperm.xlu0 %604, %v279
      %v606 = vpop.permute.xlu0 %605
      %vm608 = vcmask 261120
      %v610 = vsel %vm608, %v588, 0
      %v613 = vsel %vm608, %v589, 0
      %v616 = vsel %vm608, %v590, 0
      %v619 = vsel %vm608, %v591, 0
      %621 = vmatprep.subr.mxu0 0.0
      %622 = vmatpush1.msra.mxu0 0.0
      %623 = vmatprep.subr.mxu0 0.0
      %624 = vmatpush1.msra.mxu0 0.0
      %625 = vmatprep.subr.mxu0 0.0
      %626 = vmatpush1.msra.mxu0 0.0
      %627 = vmatprep.subr.mxu0 0.0
      %628 = vmatpush1.msra.mxu0 0.0
      %629 = vmatprep.subr.mxu0 0.0
      %630 = vmatpush1.msra.mxu0 0.0
      %631 = vmatprep.subr.mxu0 0.0
      %632 = vmatpush1.msra.mxu0 0.0
      %633 = vmatprep.subr.mxu0 0.0
      %634 = vmatpush1.msra.mxu0 0.0
      %635 = vmatprep.subr.mxu0 0.0
      %636 = vmatpush1.msra.mxu0 0.0
      %637 = vmatprep.subr.mxu0 0.0
      %638 = vmatpush1.msra.mxu0 0.0
      %639 = vmatprep.subr.mxu0 0.0
      %640 = vmatpush1.msra.mxu0 0.0
      %641 = vmatprep.subr.mxu0 0.0
      %642 = vmatpush1.msra.mxu0 0.0
      %643 = vmatprep.subr.mxu0 0.0
      %644 = vmatpush1.msra.mxu0 0.0
      %645 = vmatprep.subr.mxu0 %v587
      %646 = vmatpush1.msra.mxu0 %v586
      %647 = vmatprep.subr.mxu0 %v585
      %648 = vmatpush1.msra.mxu0 %v584
      %649 = vmatprep.subr.mxu0 %v583
      %650 = vmatpush1.msra.mxu0 %v582
      %651 = vmatprep.subr.mxu0 %v581
      %652 = vmatpush1.msra.mxu0 %v580
      %653 = vmatprep.subr.mxu0 0.0
      %654 = vmatpush2.msra.mxu0 0.0
      %655 = vmatprep.subr.mxu0 0.0
      %656 = vmatpush2.msra.mxu0 0.0
      %657 = vmatprep.subr.mxu0 0.0
      %658 = vmatpush2.msra.mxu0 0.0
      %659 = vmatprep.subr.mxu0 0.0
      %660 = vmatpush2.msra.mxu0 0.0
      %661 = vmatprep.subr.mxu0 0.0
      %662 = vmatpush2.msra.mxu0 0.0
      %663 = vmatprep.subr.mxu0 0.0
      %664 = vmatpush2.msra.mxu0 0.0
      %665 = vmatprep.subr.mxu0 0.0
      %666 = vmatpush2.msra.mxu0 0.0
      %667 = vmatprep.subr.mxu0 0.0
      %668 = vmatpush2.msra.mxu0 0.0
      %669 = vmatprep.subr.mxu0 0.0
      %670 = vmatpush2.msra.mxu0 0.0
      %671 = vmatprep.subr.mxu0 0.0
      %672 = vmatpush2.msra.mxu0 0.0
      %673 = vmatprep.subr.mxu0 0.0
      %674 = vmatpush2.msra.mxu0 0.0
      %675 = vmatprep.subr.mxu0 0.0
      %676 = vmatpush2.msra.mxu0 0.0
      %677 = vmatprep.subr.mxu0 0.0
      %678 = vmatpush2.msra.mxu0 0.0
      %679 = vmatprep.subr.mxu0 0.0
      %680 = vmatpush2.msra.mxu0 0.0
      %681 = vmatprep.subr.mxu0 0.0
      %682 = vmatpush2.msra.mxu0 0.0
      %683 = vmatprep.subr.mxu0 0.0
      %684 = vmatpush2.msra.mxu0 0.0
      %685 = vmatprep.mubr.f32.mxu0 0.0
      %686 = vmatmul.mubr.f32.gmra.mxu0 %v610
      %v687 = vpop.f32.mrf.mxu0
      %v688 = vadd.f32 %v594, %v687
      %v689 = vpop.f32.mrf.mxu0
      %v690 = vadd.f32 %v594, %v689
      %691 = vmatprep.mubr.f32.mxu0 0.0
      %692 = vmatmul.mubr.f32.gmra.mxu0 %v613
      %v693 = vpop.f32.mrf.mxu0
      %v694 = vadd.f32 %v598, %v693
      %v695 = vpop.f32.mrf.mxu0
      %v696 = vadd.f32 %v598, %v695
      %697 = vmatprep.mubr.f32.mxu0 0.0
      %698 = vmatmul.mubr.f32.gmra.mxu0 %v616
      %v699 = vpop.f32.mrf.mxu0
      %v700 = vadd.f32 %v602, %v699
      %v701 = vpop.f32.mrf.mxu0
      %v702 = vadd.f32 %v602, %v701
      %703 = vmatprep.mubr.f32.mxu0 0.0
      %704 = vmatmul.mubr.f32.gmra.mxu0 %v619
      %v705 = vpop.f32.mrf.mxu0
      %v706 = vadd.f32 %v606, %v705
      %v707 = vpop.f32.mrf.mxu0
      %v708 = vadd.f32 %v606, %v707
      %709 = vdwg.mxu0
      %v710 = vadd.f32 %v688, %v694
      %v711 = vadd.f32 %v710, %v700
      %v712 = vadd.f32 %v711, %v706
      %v713 = vrot.slane %v712, 4
      %v714 = vadd.f32 %v712, %v713
      %v715 = vrot.slane %v714, 2
      %v716 = vadd.f32 %v714, %v715
      %v717 = vrot.slane %v716, 1
      %v718 = vadd.f32 %v716, %v717
      %v719 = vadd.f32 %v690, %v696
      %v720 = vadd.f32 %v719, %v702
      %v721 = vadd.f32 %v720, %v708
      %v722 = vrot.slane %v721, 4
      %v723 = vadd.f32 %v721, %v722
      %v724 = vrot.slane %v723, 2
      %v725 = vadd.f32 %v723, %v724
      %v726 = vrot.slane %v725, 1
      %v727 = vadd.f32 %v725, %v726
      %v728 = vmul.f32 %v718, %v481
      %v729 = vmul.f32 %v727, %v481
      %v730 = vsub.f32 %v688, %v728
      %v731 = vsub.f32 %v690, %v729
      %v732 = vsub.f32 %v694, %v728
      %v733 = vsub.f32 %v696, %v729
      %v734 = vsub.f32 %v700, %v728
      %v735 = vsub.f32 %v702, %v729
      %v736 = vsub.f32 %v706, %v728
      %v737 = vsub.f32 %v708, %v729
      %v738 = vmul.f32 %v730, %v730
      %v739 = vmul.f32 %v731, %v731
      %v740 = vmul.f32 %v732, %v732
      %v741 = vmul.f32 %v733, %v733
      %v742 = vmul.f32 %v734, %v734
      %v743 = vmul.f32 %v735, %v735
      %v744 = vmul.f32 %v736, %v736
      %v745 = vmul.f32 %v737, %v737
      %v746 = vadd.f32 %v738, %v740
      %v747 = vadd.f32 %v746, %v742
      %v748 = vadd.f32 %v747, %v744
      %v749 = vrot.slane %v748, 4
      %v750 = vadd.f32 %v748, %v749
      %v751 = vrot.slane %v750, 2
      %v752 = vadd.f32 %v750, %v751
      %v753 = vrot.slane %v752, 1
      %v754 = vadd.f32 %v752, %v753
      %v755 = vadd.f32 %v739, %v741
      %v756 = vadd.f32 %v755, %v743
      %v757 = vadd.f32 %v756, %v745
      %v758 = vrot.slane %v757, 4
      %v759 = vadd.f32 %v757, %v758
      %v760 = vrot.slane %v759, 2
      %v761 = vadd.f32 %v759, %v760
      %v762 = vrot.slane %v761, 1
      %v763 = vadd.f32 %v761, %v762
      %v764 = vmul.f32 %v754, %v481
      %v765 = vmul.f32 %v763, %v481
      %v766 = vadd.f32 %v764, 1e-05
      %v767 = vadd.f32 %v765, 1e-05
      %v768 = vrsqrt.pop %v766
      %v769 = vrsqrt.pop %v767
      %v770 = vmul.f32 %v730, %v768
      %v771 = vmul.f32 %v731, %v769
      %v772 = vmul.f32 %v732, %v768
      %v773 = vmul.f32 %v733, %v769
      %v774 = vmul.f32 %v734, %v768
      %v775 = vmul.f32 %v735, %v769
      %v776 = vmul.f32 %v736, %v768
      %v777 = vmul.f32 %v737, %v769
      %778 = vset.pattern.permute.xlu0 4
      %779 = vperm.xlu0 %778, %v276
      %v780 = vpop.permute.xlu0 %779
      %782 = vset.pattern.permute.xlu0 4
      %783 = vperm.xlu0 %782, %v277
      %v784 = vpop.permute.xlu0 %783
      %786 = vset.pattern.permute.xlu0 4
      %787 = vperm.xlu0 %786, %v278
      %v788 = vpop.permute.xlu0 %787
      %790 = vset.pattern.permute.xlu0 4
      %791 = vperm.xlu0 %790, %v279
      %v792 = vpop.permute.xlu0 %791
      %v794 = vmul.f32 %v770, %v780
      %v795 = vmul.f32 %v771, %v780
      %v796 = vmul.f32 %v772, %v784
      %v797 = vmul.f32 %v773, %v784
      %v798 = vmul.f32 %v774, %v788
      %v799 = vmul.f32 %v775, %v788
      %v800 = vmul.f32 %v776, %v792
      %v801 = vmul.f32 %v777, %v792
      %802 = vset.pattern.permute.xlu0 5
      %803 = vperm.xlu0 %802, %v276
      %v804 = vpop.permute.xlu0 %803
      %806 = vset.pattern.permute.xlu0 5
      %807 = vperm.xlu0 %806, %v277
      %v808 = vpop.permute.xlu0 %807
      %810 = vset.pattern.permute.xlu0 5
      %811 = vperm.xlu0 %810, %v278
      %v812 = vpop.permute.xlu0 %811
      %814 = vset.pattern.permute.xlu0 5
      %815 = vperm.xlu0 %814, %v279
      %v816 = vpop.permute.xlu0 %815
      %v818 = vadd.f32 %v794, %v804
      %v819 = vadd.f32 %v795, %v804
      %v820 = vadd.f32 %v796, %v808
      %v821 = vadd.f32 %v797, %v808
      %v822 = vadd.f32 %v798, %v812
      %v823 = vadd.f32 %v799, %v812
      %v824 = vadd.f32 %v800, %v816
      %v825 = vadd.f32 %v801, %v816
      %v826 = vmax.f32 %v818, 0.0
      %v827 = vmax.f32 %v819, 0.0
      %v828 = vmax.f32 %v820, 0.0
      %v829 = vmax.f32 %v821, 0.0
      %v830 = vmax.f32 %v822, 0.0
      %v831 = vmax.f32 %v823, 0.0
      %v832 = vmax.f32 %v824, 0.0
      %v833 = vmax.f32 %v825, 0.0
      %v834 = vld [vmem:[%s4] sm:$0xf]
      %835 = vset.pattern.permute.xlu0 6
      %836 = vperm.xlu0 %835, %v276
      %v837 = vpop.permute.xlu0 %836
      %v840 = vsel %vm608, %v834, 0
      %842 = vmatprep.subr.mxu0 0.0
      %843 = vmatpush1.msra.mxu0 0.0
      %844 = vmatprep.subr.mxu0 0.0
      %845 = vmatpush1.msra.mxu0 0.0
      %846 = vmatprep.subr.mxu0 0.0
      %847 = vmatpush1.msra.mxu0 0.0
      %848 = vmatprep.subr.mxu0 0.0
      %849 = vmatpush1.msra.mxu0 0.0
      %850 = vmatprep.subr.mxu0 0.0
      %851 = vmatpush1.msra.mxu0 0.0
      %852 = vmatprep.subr.mxu0 0.0
      %853 = vmatpush1.msra.mxu0 0.0
      %854 = vmatprep.subr.mxu0 0.0
      %855 = vmatpush1.msra.mxu0 0.0
      %856 = vmatprep.subr.mxu0 0.0
      %857 = vmatpush1.msra.mxu0 0.0
      %858 = vmatprep.subr.mxu0 0.0
      %859 = vmatpush1.msra.mxu0 0.0
      %860 = vmatprep.subr.mxu0 0.0
      %861 = vmatpush1.msra.mxu0 0.0
      %862 = vmatprep.subr.mxu0 0.0
      %863 = vmatpush1.msra.mxu0 0.0
      %864 = vmatprep.subr.mxu0 0.0
      %865 = vmatpush1.msra.mxu0 0.0
      %866 = vmatprep.subr.mxu0 %v833
      %867 = vmatpush1.msra.mxu0 %v832
      %868 = vmatprep.subr.mxu0 %v831
      %869 = vmatpush1.msra.mxu0 %v830
      %870 = vmatprep.subr.mxu0 %v829
      %871 = vmatpush1.msra.mxu0 %v828
      %872 = vmatprep.subr.mxu0 %v827
      %873 = vmatpush1.msra.mxu0 %v826
      %874 = vmatprep.subr.mxu0 0.0
      %875 = vmatpush2.msra.mxu0 0.0
      %876 = vmatprep.subr.mxu0 0.0
      %877 = vmatpush2.msra.mxu0 0.0
      %878 = vmatprep.subr.mxu0 0.0
      %879 = vmatpush2.msra.mxu0 0.0
      %880 = vmatprep.subr.mxu0 0.0
      %881 = vmatpush2.msra.mxu0 0.0
      %882 = vmatprep.subr.mxu0 0.0
      %883 = vmatpush2.msra.mxu0 0.0
      %884 = vmatprep.subr.mxu0 0.0
      %885 = vmatpush2.msra.mxu0 0.0
      %886 = vmatprep.subr.mxu0 0.0
      %887 = vmatpush2.msra.mxu0 0.0
      %888 = vmatprep.subr.mxu0 0.0
      %889 = vmatpush2.msra.mxu0 0.0
      %890 = vmatprep.subr.mxu0 0.0
      %891 = vmatpush2.msra.mxu0 0.0
      %892 = vmatprep.subr.mxu0 0.0
      %893 = vmatpush2.msra.mxu0 0.0
      %894 = vmatprep.subr.mxu0 0.0
      %895 = vmatpush2.msra.mxu0 0.0
      %896 = vmatprep.subr.mxu0 0.0
      %897 = vmatpush2.msra.mxu0 0.0
      %898 = vmatprep.subr.mxu0 0.0
      %899 = vmatpush2.msra.mxu0 0.0
      %900 = vmatprep.subr.mxu0 0.0
      %901 = vmatpush2.msra.mxu0 0.0
      %902 = vmatprep.subr.mxu0 0.0
      %903 = vmatpush2.msra.mxu0 0.0
      %904 = vmatprep.subr.mxu0 0.0
      %905 = vmatpush2.msra.mxu0 0.0
      %906 = vmatprep.mubr.f32.mxu0 0.0
      %907 = vmatmul.mubr.f32.gmra.mxu0 %v840
      %v908 = vpop.f32.mrf.mxu0
      %v909 = vadd.f32 %v837, %v908
      %v910 = vpop.f32.mrf.mxu0
      %v911 = vadd.f32 %v837, %v910
      %912 = vdwg.mxu0
      %vm913 = vcmask 1043456
      %v914 = vsel %vm913, %v909, -inf
      %v915 = vrot.slane %v914, 4
      %v916 = vmax.f32 %v914, %v915
      %v917 = vrot.slane %v916, 2
      %v918 = vmax.f32 %v916, %v917
      %v919 = vrot.slane %v918, 1
      %v920 = vmax.f32 %v918, %v919
      %v921 = vsel %vm913, %v911, -inf
      %v922 = vrot.slane %v921, 4
      %v923 = vmax.f32 %v921, %v922
      %v924 = vrot.slane %v923, 2
      %v925 = vmax.f32 %v923, %v924
      %v926 = vrot.slane %v925, 1
      %v927 = vmax.f32 %v925, %v926
      %v928 = vsub.f32 %v909, %v920
      %v929 = vsub.f32 %v911, %v927
      %v930 = vmul.f32 %v928, 1.442695
      %v931 = vpow.pop %v930
      %v932 = vmul.f32 %v929, 1.442695
      %v933 = vpow.pop %v932
      %v934 = vsel %vm913, %v931, 0.0
      %v935 = vrot.slane %v934, 4
      %v936 = vadd.f32 %v934, %v935
      %v937 = vrot.slane %v936, 2
      %v938 = vadd.f32 %v936, %v937
      %v939 = vrot.slane %v938, 1
      %v940 = vadd.f32 %v938, %v939
      %v941 = vsel %vm913, %v933, 0.0
      %v942 = vrot.slane %v941, 4
      %v943 = vadd.f32 %v941, %v942
      %v944 = vrot.slane %v943, 2
      %v945 = vadd.f32 %v943, %v944
      %v946 = vrot.slane %v945, 1
      %v947 = vadd.f32 %v945, %v946
      %v948 = vrcp.pop %v940
      %v949 = vmul.f32 %v931, %v948
      %v950 = vrcp.pop %v947
      %v951 = vmul.f32 %v933, %v950
      %v954 = vcombine.low %v949, %v951
      %956 = vst [vmem:[%s272] sm:$0xff] %v954
      %s957 = smul.u32 2, %s17
      %p958 = scmp.lt.s32.totalorder %s957, 3
      %s959 = scalar_select %p958, %s957, 3
      %s960 = smul.addr %s959, 4
      %s961 = scalar_lea.vmem %s6, %s960
      // Predicated region
      $region45: #{gating_network_forward.1} parent=43 // pred_check
        %p962 = pneg %p171
      $region46: #{gating_network_forward.1} parent=43 // pred_check_branch
        %964 = sbr.rel (%p962) target = $region48
      $region47: #{gating_network_forward.1} parent=43 // pred_region
        %s965 = smul.u32 2, %s17
      $region48: #{gating_network_forward.1} parent=43 // pred_fallthru
        _
    $region44: #{gating_network_forward.1} parent=5 // pred_fallthru
      _
    %p966 = scmp.le.s32.totalorder 2, %s12
    // Predicated region
    $region49: #{gating_network_forward.1} parent=5 // pred_check
      %p967 = pneg %p966
    $region50: #{gating_network_forward.1} parent=5 // pred_check_branch
      %969 = sbr.rel (%p967) target = $region52
    $region51: #{gating_network_forward.1} parent=5 // pred_region
      %s970 = ssub.s32 %s12, 2
      // Predicated region
      $region53: #{gating_network_forward.1} parent=51 // pred_check
        %p971 = pneg %p177
      $region54: #{gating_network_forward.1} parent=51 // pred_check_branch
        %973 = sbr.rel (%p971) target = $region56
      $region55: #{gating_network_forward.1} parent=51 // pred_region
        %s974 = smul.u32 2, %s18
        %p975 = scmp.lt.s32.totalorder %s974, 3
        %s976 = scalar_select %p975, %s974, 3
        %s977 = smul.addr %s976, 4
        %s978 = scalar_lea.vmem %s6, %s977
      $region56: #{gating_network_forward.1} parent=51 // pred_fallthru
        _
    $region52: #{gating_network_forward.1} parent=5 // pred_fallthru
      _
  $region6: #{gating_network_forward.1} parent=0 // loop_footer
    %s16 = sadd.s32 1, %s12
  $region7: #{gating_network_forward.1} parent=0 // loop_footer_branch
    %11 = sbr.rel target = $region3
  $region8: #{gating_network_forward.1} parent=0 // loop_exit
    _

</llo_original>
